<compile_context>
chip_gen: v7x
topology: tpu7x:2x2x1
jax: 0.10.0
libtpu: 0.0.40
codegen_flags: <defaults>
</compile_context>

<pallas_src>
import functools

import jax
import jax.numpy as jnp
from jax.experimental import pallas as pl
from jax.experimental.pallas import tpu as pltpu


def _round_up(a: int, b: int) -> int:
    return (a + b - 1) // b * b


# ---------------------------------------------------------------------------
# Kernel 1: fused global sum + max pooling over the spatial axis.
#   x view: (rows, S) with rows = N*C.  Grid = (row_blocks, spatial_tiles).
#   Outputs (accumulated in-place across the "arbitrary" spatial axis):
#     sum_ref, max_ref : (rows, 1) f32
# ---------------------------------------------------------------------------
def _pool_kernel(x_ref, sum_ref, max_ref, *, s_true: int, ts: int, ragged: bool):
    j = pl.program_id(1)

    @pl.when(j == 0)
    def _init():
        sum_ref[...] = jnp.zeros_like(sum_ref)
        max_ref[...] = jnp.full_like(max_ref, -jnp.inf)

    x = x_ref[...].astype(jnp.float32)                          # (TR, TS)

    def _accumulate(xs, xm):
        sum_ref[...] += jnp.sum(xs, axis=-1, keepdims=True)
        max_ref[...] = jnp.maximum(max_ref[...],
                                   jnp.max(xm, axis=-1, keepdims=True))

    if ragged:
        last = pl.num_programs(1) - 1

        @pl.when(j < last)                      # fast path: no masking work
        def _body():
            _accumulate(x, x)

        @pl.when(j == last)                     # only the ragged tail pays for masks
        def _tail():
            col = j * ts + jax.lax.broadcasted_iota(jnp.int32, x.shape, 1)
            valid = col < s_true
            _accumulate(jnp.where(valid, x, 0.0),
                        jnp.where(valid, x, -jnp.inf))
    else:
        _accumulate(x, x)


# ---------------------------------------------------------------------------
# Kernel 2: gating multiply y = x * scale (scale broadcast over spatial).
# ---------------------------------------------------------------------------
def _gate_kernel(x_ref, s_ref, o_ref):
    # Multiply in x's native dtype (no bulk f32 upcast of the activation);
    # only the tiny (TR, 1) scale column is cast.
    o_ref[...] = x_ref[...] * s_ref[...].astype(x_ref.dtype)


# ---------------------------------------------------------------------------
# Tiling helpers
# ---------------------------------------------------------------------------
_POOL_BLOCK_BUDGET = 6 * 1024 * 1024    # bytes per x block (Pallas double-buffers it)
_GATE_BLOCK_BUDGET = 4 * 1024 * 1024    # bytes per x block (= per y block)
_MAX_LANE_TILE = 32768                  # keep blocks lane-dense but bounded


def _lane_tile(s: int, row_tile: int, itemsize: int, budget: int) -> int:
    """Largest spatial tile: a multiple of 128 within the byte budget, or full S."""
    cap = max(128, min(_MAX_LANE_TILE,
                       (budget // max(1, row_tile * itemsize)) // 128 * 128))
    return s if s <= cap else cap


def _vmem_limit(*block_bytes: int) -> int:
    need = 2 * sum(block_bytes) + (2 << 20)          # double buffering + slack
    return int(min(max(need, 32 << 20), 48 << 20))   # v5e floor / v7x-safe cap


# ---------------------------------------------------------------------------
# Wrapper
# ---------------------------------------------------------------------------
@jax.jit
def channel_attention(x: jax.Array, w1: jax.Array, w2: jax.Array) -> jax.Array:
    """ChannelAttention forward.

    x : (N, C, D, H, W)   NCDHW activation (PyTorch layout)
    w1: (C // r, C)       fc1 = Conv3d(C, C//r, 1, bias=False) weight (squeezed)
    w2: (C, C // r)       fc2 = Conv3d(C//r, C, 1, bias=False) weight (squeezed)
    """
    N, C, D, H, W = x.shape
    S = D * H * W
    rows = N * C
    itemsize = jnp.dtype(x.dtype).itemsize

    # (N, C, D, H, W) -> (N*C, S): contiguous reshape, no HBM copy.
    x2 = x.reshape(rows, S)

    # ---- Kernel 1: global sum & max per row ---------------------------------
    # Row tile: multiple of 8 (or the full dim); split into >= 2 row blocks when
    # possible so the "parallel" axis can use both TensorCores on v7x.
    if rows <= 8:
        tr_pool = rows
    else:
        tr_pool = min(256, _round_up((rows + 1) // 2, 8))
    ts_pool = _lane_tile(S, tr_pool, itemsize, _POOL_BLOCK_BUDGET)
    ragged = (S % ts_pool) != 0
    pool_block_bytes = tr_pool * ts_pool * itemsize

    pool_kernel = functools.partial(
        _pool_kernel, s_true=S, ts=ts_pool, ragged=ragged)

    sums, maxes = pl.pallas_call(
        pool_kernel,
        out_shape=(jax.ShapeDtypeStruct((rows, 1), jnp.float32),
                   jax.ShapeDtypeStruct((rows, 1), jnp.float32)),
        grid_spec=pltpu.PrefetchScalarGridSpec(
            num_scalar_prefetch=0,
            grid=(pl.cdiv(rows, tr_pool), pl.cdiv(S, ts_pool)),
            in_specs=[pl.BlockSpec((tr_pool, ts_pool), lambda i, j: (i, j))],
            out_specs=[pl.BlockSpec((tr_pool, 1), lambda i, j: (i, 0)),
                       pl.BlockSpec((tr_pool, 1), lambda i, j: (i, 0))],
        ),
        compiler_params=pltpu.CompilerParams(
            dimension_semantics=("parallel", "arbitrary"),
            vmem_limit_bytes=_vmem_limit(pool_block_bytes)),
    )(x2)

    # ---- Tiny channel MLP + sigmoid (negligible flops; plain JAX) ------------
    avg = sums.reshape(N, C) * (1.0 / float(S))
    mx = maxes.reshape(N, C)
    w1f = w1.astype(jnp.float32)
    w2f = w2.astype(jnp.float32)

    def mlp(p):
        h = jnp.maximum(
            jnp.matmul(p, w1f.T, precision=jax.lax.Precision.HIGHEST), 0.0)
        return jnp.matmul(h, w2f.T, precision=jax.lax.Precision.HIGHEST)

    scale = jax.nn.sigmoid(mlp(avg) + mlp(mx)).reshape(rows, 1)   # (rows, 1) f32

    # ---- Kernel 2: y = x * scale ---------------------------------------------
    tr_gate = min(rows, 256) if rows % 8 == 0 else rows
    ts_gate = _lane_tile(S, tr_gate, itemsize, _GATE_BLOCK_BUDGET)
    gate_block_bytes = tr_gate * ts_gate * itemsize

    # TODO(synk): pass input_output_aliases={0: 0} here when the caller donates
    # x (saves the second full-size HBM allocation; would add a copy otherwise).
    y = pl.pallas_call(
        _gate_kernel,
        out_shape=jax.ShapeDtypeStruct((rows, S), x.dtype),
        grid_spec=pltpu.PrefetchScalarGridSpec(
            num_scalar_prefetch=0,
            grid=(pl.cdiv(rows, tr_gate), pl.cdiv(S, ts_gate)),
            in_specs=[pl.BlockSpec((tr_gate, ts_gate), lambda i, j: (i, j)),
                      pl.BlockSpec((tr_gate, 1), lambda i, j: (i, 0))],
            out_specs=pl.BlockSpec((tr_gate, ts_gate), lambda i, j: (i, j)),
        ),
        compiler_params=pltpu.CompilerParams(
            dimension_semantics=("parallel", "parallel"),
            vmem_limit_bytes=_vmem_limit(gate_block_bytes, gate_block_bytes)),
    )(x2, scale)

    return y.reshape(N, C, D, H, W)


# ---------------------------------------------------------------------------
# Pure-JAX reference (matches the PyTorch module)
# ---------------------------------------------------------------------------
def channel_attention_ref(x, w1, w2):
    avg = jnp.mean(x.astype(jnp.float32), axis=(2, 3, 4))   # AdaptiveAvgPool3d(1)
    mx = jnp.max(x.astype(jnp.float32), axis=(2, 3, 4))     # AdaptiveMaxPool3d(1)

    def mlp(p):
        h = jnp.maximum(
            jnp.matmul(p, w1.T.astype(jnp.float32),
                       precision=jax.lax.Precision.HIGHEST), 0.0)
        return jnp.matmul(h, w2.T.astype(jnp.float32),
                          precision=jax.lax.Precision.HIGHEST)

    scale = jax.nn.sigmoid(mlp(avg) + mlp(mx))
    return (x * scale[:, :, None, None, None].astype(x.dtype)).astype(x.dtype)


if __name__ == "__main__":
    key = jax.random.PRNGKey(0)
    kx, k1, k2 = jax.random.split(key, 3)

    # Small VNet-like NCDHW activation; reduction=16 as in the module default.
    N, C, D, H, W = 2, 32, 4, 8, 16
    reduction = 16
    Cr = C // reduction                                   # = 2

    x = jax.random.normal(kx, (N, C, D, H, W), dtype=jnp.float32)
    w1 = jax.random.normal(k1, (Cr, C), dtype=jnp.float32) * 0.2  # fc1 weight
    w2 = jax.random.normal(k2, (C, Cr), dtype=jnp.float32) * 0.2  # fc2 weight

    y = channel_attention(x, w1, w2)
    jax.block_until_ready(y)

    y_ref = channel_attention_ref(x, w1, w2)
    assert y.shape == x.shape and y.dtype == x.dtype
    assert jnp.allclose(y, y_ref, atol=1e-5, rtol=1e-5), \
        float(jnp.max(jnp.abs(y - y_ref)))
    print("KERNEL_OK")
</pallas_src>

<mosaic_0001>
module attributes {stable_mosaic.version = 11 : i64} {
  func.func @_pool_kernel(%arg0: i32, %arg1: i32, %arg2: memref<32x512xf32, #tpu.memory_space<vmem>>, %arg3: memref<32x1xf32, #tpu.memory_space<vmem>>, %arg4: memref<32x1xf32, #tpu.memory_space<vmem>>) attributes {dimension_semantics = [#tpu.dimension_semantics<parallel>, #tpu.dimension_semantics<arbitrary>], iteration_bounds = array<i64: 2, 1>, scalar_prefetch = 0 : i64, scratch_operands = 0 : i64, tpu.core_type = #tpu.core_type<tc>, window_params = [{transform_indices = @transform_0, window_bounds = array<i64: 32, 512>}, {transform_indices = @transform_1, window_bounds = array<i64: 32, 1>}, {transform_indices = @transform_2, window_bounds = array<i64: 32, 1>}]} {
    %c0_i32 = arith.constant 0 : i32
    %0 = arith.cmpi eq, %arg1, %c0_i32 : i32
    %1 = arith.extui %0 : i1 to i32
    %c0_i32_0 = arith.constant 0 : i32
    %2 = arith.cmpi ne, %1, %c0_i32_0 : i32
    scf.if %2 {
      %cst_11 = arith.constant 0.000000e+00 : f32
      %14 = vector.broadcast %cst_11 : f32 to vector<32x1xf32>
      %c0_12 = arith.constant 0 : index
      %c0_13 = arith.constant 0 : index
      %15 = vector.load %arg3[%c0_12, %c0_13] : memref<32x1xf32, #tpu.memory_space<vmem>>, vector<32x1xf32>
      tpu.vector_store %arg3[%c0_12, %c0_13], %14 {strides = array<i32>} : memref<32x1xf32, #tpu.memory_space<vmem>>, vector<32x1xf32>,
      %cst_14 = arith.constant 0xFF800000 : f32
      %16 = vector.broadcast %cst_14 : f32 to vector<32x1xf32>
      %c0_15 = arith.constant 0 : index
      %c0_16 = arith.constant 0 : index
      %17 = vector.load %arg4[%c0_15, %c0_16] : memref<32x1xf32, #tpu.memory_space<vmem>>, vector<32x1xf32>
      tpu.vector_store %arg4[%c0_15, %c0_16], %16 {strides = array<i32>} : memref<32x1xf32, #tpu.memory_space<vmem>>, vector<32x1xf32>,
    } else {
    }
    %c0 = arith.constant 0 : index
    %c0_1 = arith.constant 0 : index
    %3 = vector.load %arg2[%c0, %c0_1] : memref<32x512xf32, #tpu.memory_space<vmem>>, vector<32x512xf32>
    %c0_2 = arith.constant 0 : index
    %c0_3 = arith.constant 0 : index
    %4 = vector.load %arg3[%c0_2, %c0_3] : memref<32x1xf32, #tpu.memory_space<vmem>>, vector<32x1xf32>
    %cst = arith.constant dense<0.000000e+00> : vector<32xf32>
    %5 = vector.multi_reduction <add>, %3, %cst [1] : vector<32x512xf32> to vector<32xf32>
    %6 = vector.shape_cast %5 : vector<32xf32> to vector<32x1xf32>
    %7 = arith.addf %4, %6 : vector<32x1xf32>
    %c0_4 = arith.constant 0 : index
    %c0_5 = arith.constant 0 : index
    %8 = vector.load %arg3[%c0_4, %c0_5] : memref<32x1xf32, #tpu.memory_space<vmem>>, vector<32x1xf32>
    tpu.vector_store %arg3[%c0_4, %c0_5], %7 {strides = array<i32>} : memref<32x1xf32, #tpu.memory_space<vmem>>, vector<32x1xf32>,
    %c0_6 = arith.constant 0 : index
    %c0_7 = arith.constant 0 : index
    %9 = vector.load %arg4[%c0_6, %c0_7] : memref<32x1xf32, #tpu.memory_space<vmem>>, vector<32x1xf32>
    %cst_8 = arith.constant dense<0xFF800000> : vector<32xf32>
    %10 = vector.multi_reduction <maximumf>, %3, %cst_8 [1] : vector<32x512xf32> to vector<32xf32>
    %11 = vector.shape_cast %10 : vector<32xf32> to vector<32x1xf32>
    %12 = arith.maximumf %9, %11 : vector<32x1xf32>
    %c0_9 = arith.constant 0 : index
    %c0_10 = arith.constant 0 : index
    %13 = vector.load %arg4[%c0_9, %c0_10] : memref<32x1xf32, #tpu.memory_space<vmem>>, vector<32x1xf32>
    tpu.vector_store %arg4[%c0_9, %c0_10], %12 {strides = array<i32>} : memref<32x1xf32, #tpu.memory_space<vmem>>, vector<32x1xf32>,
    return
  }
  func.func @transform_0(%arg0: i32, %arg1: i32) -> (i32, i32) {
    %c0_i32 = arith.constant 0 : i32
    return %arg0, %arg1 : i32, i32
  }
  func.func @transform_1(%arg0: i32, %arg1: i32) -> (i32, i32) {
    %c0_i32 = arith.constant 0 : i32
    %c0_i32_0 = arith.constant 0 : i32
    return %arg0, %c0_i32 : i32, i32
  }
  func.func @transform_2(%arg0: i32, %arg1: i32) -> (i32, i32) {
    %c0_i32 = arith.constant 0 : i32
    %c0_i32_0 = arith.constant 0 : i32
    return %arg0, %c0_i32 : i32, i32
  }
}

module attributes {stable_mosaic.version = 11 : i64} {
  func.func @_gate_kernel(%arg0: i32, %arg1: i32, %arg2: memref<64x512xf32, #tpu.memory_space<vmem>>, %arg3: memref<64x1xf32, #tpu.memory_space<vmem>>, %arg4: memref<64x512xf32, #tpu.memory_space<vmem>>) attributes {dimension_semantics = [#tpu.dimension_semantics<parallel>, #tpu.dimension_semantics<parallel>], iteration_bounds = array<i64: 1, 1>, scalar_prefetch = 0 : i64, scratch_operands = 0 : i64, tpu.core_type = #tpu.core_type<tc>, window_params = [{transform_indices = @transform_0, window_bounds = array<i64: 64, 512>}, {transform_indices = @transform_1, window_bounds = array<i64: 64, 1>}, {transform_indices = @transform_2, window_bounds = array<i64: 64, 512>}]} {
    %c0 = arith.constant 0 : index
    %c0_0 = arith.constant 0 : index
    %0 = vector.load %arg2[%c0, %c0_0] : memref<64x512xf32, #tpu.memory_space<vmem>>, vector<64x512xf32>
    %c0_1 = arith.constant 0 : index
    %c0_2 = arith.constant 0 : index
    %1 = vector.load %arg3[%c0_1, %c0_2] : memref<64x1xf32, #tpu.memory_space<vmem>>, vector<64x1xf32>
    %2 = vector.broadcast %1 : vector<64x1xf32> to vector<64x512xf32>
    %3 = arith.mulf %0, %2 : vector<64x512xf32>
    %c0_3 = arith.constant 0 : index
    %c0_4 = arith.constant 0 : index
    %4 = vector.load %arg4[%c0_3, %c0_4] : memref<64x512xf32, #tpu.memory_space<vmem>>, vector<64x512xf32>
    tpu.vector_store %arg4[%c0_3, %c0_4], %3 {strides = array<i32>} : memref<64x512xf32, #tpu.memory_space<vmem>>, vector<64x512xf32>,
    return
  }
  func.func @transform_0(%arg0: i32, %arg1: i32) -> (i32, i32) {
    %c0_i32 = arith.constant 0 : i32
    return %arg0, %arg1 : i32, i32
  }
  func.func @transform_1(%arg0: i32, %arg1: i32) -> (i32, i32) {
    %c0_i32 = arith.constant 0 : i32
    %c0_i32_0 = arith.constant 0 : i32
    return %arg0, %c0_i32 : i32, i32
  }
  func.func @transform_2(%arg0: i32, %arg1: i32) -> (i32, i32) {
    %c0_i32 = arith.constant 0 : i32
    return %arg0, %arg1 : i32, i32
  }
}

</mosaic_0001>

<llo_original>
// kernel: channel_attention.2
$region0: #{channel_attention.2}
  #allocation0 [shape = 'u32[]', space=smem, size = 0x4, offset = 0x4, fixed_abs, tag = 'smem constant byte address 0x4 - core index']
  #allocation1 [shape = 'u32[144,128]{1,0:T(1,128)}', space=vmem, size = 0x12000, scoped, tag = 'internal scratch']
  %s0 = inlined_call_operand.vmem [shape: f32[64,512], index: 0, kind: input, shape index: {}]
  %s1 = inlined_call_operand.vmem [shape: f32[64,1], index: 1, kind: output, shape index: {0}]
  %s2 = inlined_call_operand.vmem [shape: f32[64,1], index: 2, kind: output, shape index: {1}]
  %3 = xla_tuple %s1, %s2
  %s4 = sld [smem:[#allocation0]]
  $region49: #{channel_attention.2} parent=0
    _
  %s6 = ssub.s32 1, %s4
  %s7 = scalar_select 0, %s6, %s4
  loop: start=0, step=1, limit=4
  $region2: #{channel_attention.2} parent=0 // loop_pre_header
    _
  $region3: #{channel_attention.2} parent=0 // loop_header
    %s9 = sphi 0, %s13
    %p10 = scmp.ge.s32.totalorder %s9, 4
    %s16 = sphi 0, %s28
    %s17 = sphi 0, %s24
    %s18 = sphi 0, %s16
    %s19 = sphi 0, %s17
    %s20 = sphi 0, %s18
    %s21 = sphi 0, %s19
    %s33 = sphi 0, %s35
    %s36 = sphi 0, %s33
    %s37 = sphi 0, %s36
    %s53 = sphi 0, %s37
    %s59 = sphi 0, %s61
    %s62 = sphi 0, %s59
    %s63 = sphi 0, %s62
    %s79 = sphi 0, %s63
    %s85 = sphi 0, %s87
    %s88 = sphi 0, %s85
    %s89 = sphi 0, %s88
    %s105 = sphi 0, %s89
  $region4: #{channel_attention.2} parent=0 // loop_header_branch
    %12 = sbr.rel (%p10) target = $region8
  $region5: #{channel_attention.2} parent=0 // loop_body
    %s14 = ssub.s32 %s9, 1
    %s15 = ssub.s32 %s9, 2
    %s22 = sadd.s32 1, %s17
    %p23 = scmp.ge.s32.totalorder %s22, 1
    %s24 = scalar_select %p23, 0, %s22
    %s25 = sadd.s32 1, %s16
    %s26 = scalar_select %p23, %s25, %s16
    %p27 = scmp.ge.s32.totalorder %s26, 2
    %s28 = scalar_select %p27, 0, %s26
    %s29 = ssub.s32 %s16, %s28
    %s30 = ssub.s32 %s17, %s24
    %s31 = sor.u32 %s29, %s30
    %p32 = scmp.eq.s32.totalorder %s31, 0
    %s34 = sadd.s32 %s33, 1
    %s35 = scalar_select %p32, %s33, %s34
    %p38 = pneg %p32
    %p39 = scmp.eq.s32.totalorder %s9, 1
    %p40 = por %p38, %p39
    %p41 = scmp.ne.s32.totalorder %s33, %s36
    %p42 = scmp.eq.s32.totalorder %s9, 0
    %p43 = por %p41, %p42
    %p44 = scmp.ne.s32.totalorder %s33, %s36
    %p45 = scmp.eq.s32.totalorder %s14, 1
    %p46 = por %p44, %p45
    %p47 = scmp.ne.s32.totalorder %s36, %s37
    %p48 = scmp.eq.s32.totalorder %s14, 0
    %p49 = por %p47, %p48
    %p50 = scmp.ne.s32.totalorder %s36, %s37
    %p51 = scmp.eq.s32.totalorder %s15, 1
    %p52 = por %p50, %p51
    %p54 = scmp.ne.s32.totalorder %s37, %s53
    %p55 = scmp.eq.s32.totalorder %s15, 0
    %p56 = por %p54, %p55
    %s57 = ssub.s32 %s16, %s28
    %p58 = scmp.eq.s32.totalorder %s57, 0
    %s60 = sadd.s32 %s59, 1
    %s61 = scalar_select %p58, %s59, %s60
    %p64 = pneg %p58
    %p65 = scmp.eq.s32.totalorder %s9, 1
    %p66 = por %p64, %p65
    %p67 = scmp.ne.s32.totalorder %s59, %s62
    %p68 = scmp.eq.s32.totalorder %s9, 0
    %p69 = por %p67, %p68
    %p70 = scmp.ne.s32.totalorder %s59, %s62
    %p71 = scmp.eq.s32.totalorder %s14, 1
    %p72 = por %p70, %p71
    %p73 = scmp.ne.s32.totalorder %s62, %s63
    %p74 = scmp.eq.s32.totalorder %s14, 0
    %p75 = por %p73, %p74
    %p76 = scmp.ne.s32.totalorder %s62, %s63
    %p77 = scmp.eq.s32.totalorder %s15, 1
    %p78 = por %p76, %p77
    %p80 = scmp.ne.s32.totalorder %s63, %s79
    %p81 = scmp.eq.s32.totalorder %s15, 0
    %p82 = por %p80, %p81
    %s83 = ssub.s32 %s16, %s28
    %p84 = scmp.eq.s32.totalorder %s83, 0
    %s86 = sadd.s32 %s85, 1
    %s87 = scalar_select %p84, %s85, %s86
    %p90 = pneg %p84
    %p91 = scmp.eq.s32.totalorder %s9, 1
    %p92 = por %p90, %p91
    %p93 = scmp.ne.s32.totalorder %s85, %s88
    %p94 = scmp.eq.s32.totalorder %s9, 0
    %p95 = por %p93, %p94
    %p96 = scmp.ne.s32.totalorder %s85, %s88
    %p97 = scmp.eq.s32.totalorder %s14, 1
    %p98 = por %p96, %p97
    %p99 = scmp.ne.s32.totalorder %s88, %s89
    %p100 = scmp.eq.s32.totalorder %s14, 0
    %p101 = por %p99, %p100
    %p102 = scmp.ne.s32.totalorder %s88, %s89
    %p103 = scmp.eq.s32.totalorder %s15, 1
    %p104 = por %p102, %p103
    %p106 = scmp.ne.s32.totalorder %s89, %s105
    %p107 = scmp.eq.s32.totalorder %s15, 0
    %p108 = por %p106, %p107
    %p109 = scmp.le.s32.totalorder 1, %s9
    %p110 = scmp.lt.s32.totalorder %s9, 3
    %p111 = pnand %p109, %p110
    %p112 = pneg %p111
    // Predicated region
    $region9: #{channel_attention.2} parent=5 // pred_check
      _
    $region10: #{channel_attention.2} parent=5 // pred_check_branch
      %114 = sbr.rel (%p111) target = $region12
    $region11: #{channel_attention.2} parent=5 // pred_region
      %s115 = ssub.s32 %s9, 1
    $region12: #{channel_attention.2} parent=5 // pred_fallthru
      _
    %p116 = scmp.lt.s32.totalorder %s9, 2
    // Predicated region
    $region13: #{channel_attention.2} parent=5 // pred_check
      %p117 = pneg %p116
    $region14: #{channel_attention.2} parent=5 // pred_check_branch
      %119 = sbr.rel (%p117) target = $region16
    $region15: #{channel_attention.2} parent=5 // pred_region
      // Predicated region
      $region17: #{channel_attention.2} parent=15 // pred_check
        %p120 = pneg %p43
      $region18: #{channel_attention.2} parent=15 // pred_check_branch
        %122 = sbr.rel (%p120) target = $region20
      $region19: #{channel_attention.2} parent=15 // pred_region
        %s123 = smul.u32 4, %s16
        %s124 = smul.u32 4, %s17
        %p125 = scmp.lt.s32.totalorder %s123, 7
        %s126 = scalar_select %p125, %s123, 7
        %p127 = scmp.lt.s32.totalorder %s124, 3
        %s128 = scalar_select %p127, %s124, 3
        %s129 = smul.addr %s126, 4
        %s130 = sadd.s32 %s128, %s129
        %s131 = smul.addr %s130, 8
        %s132 = scalar_lea.vmem %s0, %s131
        %s133 = smul.u32 4, %s16
        %s134 = smul.u32 4, %s17
      $region20: #{channel_attention.2} parent=15 // pred_fallthru
        _
    $region16: #{channel_attention.2} parent=5 // pred_fallthru
      _
    %p135 = scmp.le.s32.totalorder 1, %s9
    %p136 = scmp.lt.s32.totalorder %s9, 3
    %p137 = pnand %p135, %p136
    %p138 = pneg %p137
    // Predicated region
    $region21: #{channel_attention.2} parent=5 // pred_check
      _
    $region22: #{channel_attention.2} parent=5 // pred_check_branch
      %140 = sbr.rel (%p137) target = $region24
    $region23: #{channel_attention.2} parent=5 // pred_region
      %s141 = ssub.s32 %s9, 1
      %s142 = smul.u32 4, %s18
      %s143 = smul.u32 4, %s19
      %p144 = scmp.lt.s32.totalorder %s142, 7
      %s145 = scalar_select %p144, %s142, 7
      %p146 = scmp.lt.s32.totalorder %s143, 3
      %s147 = scalar_select %p146, %s143, 3
      %s148 = smul.addr %s145, 4
      %s149 = sadd.s32 %s147, %s148
      %s150 = smul.addr %s149, 8
      %s151 = scalar_lea.vmem %s0, %s150
      %p152 = pneg %p49
      %p153 = pneg %p46
      %p154 = pneg %p75
      %p155 = pneg %p72
      %s156 = smul.u32 4, %s18
      %p157 = scmp.lt.s32.totalorder %s156, 7
      %s158 = scalar_select %p157, %s156, 7
      %s159 = smul.addr %s158, 8
      %s160 = scalar_lea.vmem %s1, %s159
      %p161 = pneg %p101
      %p162 = pneg %p98
      %s163 = smul.u32 4, %s18
      %p164 = scmp.lt.s32.totalorder %s163, 7
      %s165 = scalar_select %p164, %s163, 7
      %s166 = smul.addr %s165, 8
      %s167 = scalar_lea.vmem %s2, %s166
      %s168 = smul.u32 4, %s18
      %s169 = smul.u32 4, %s19
      %p170 = scmp.lt.s32.totalorder %s168, 7
      %s171 = scalar_select %p170, %s168, 7
      %p172 = scmp.lt.s32.totalorder %s169, 3
      %s173 = scalar_select %p172, %s169, 3
      %s174 = smul.addr %s171, 4
      %s175 = sadd.s32 %s173, %s174
      %s176 = smul.addr %s175, 8
      %s177 = scalar_lea.vmem %s0, %s176
      %s178 = smul.u32 4, %s18
      %s179 = smul.u32 4, %s19
      %s180 = smul.u32 4, %s18
      %p181 = scmp.lt.s32.totalorder %s180, 7
      %s182 = scalar_select %p181, %s180, 7
      %s183 = smul.addr %s182, 8
      %s184 = scalar_lea.vmem %s1, %s183
      %s185 = smul.u32 4, %s18
      %s186 = smul.u32 4, %s18
      %p187 = scmp.lt.s32.totalorder %s186, 7
      %s188 = scalar_select %p187, %s186, 7
      %s189 = smul.addr %s188, 8
      %s190 = scalar_lea.vmem %s2, %s189
      %s191 = smul.u32 4, %s18
      %p192 = scmp.eq.s32.totalorder %s19, 0
      // Predicated region
      $region25: #{channel_attention.2} parent=23 // pred_check
        %p193 = pneg %p192
      $region26: #{channel_attention.2} parent=23 // pred_check_branch
        %195 = sbr.rel (%p193) target = $region28
      $region27: #{channel_attention.2} parent=23 // pred_region
        %vm196 = vcmask 7168
        %197 = vst.msk [vmem:[%s184] sm:$0xff] %vm196, 0.0
        %198 = vst.msk [vmem:[%s184 + $0x8] sm:$0xff] %vm196, 0.0
        %199 = vst.msk [vmem:[%s184 + $0x10] sm:$0xff] %vm196, 0.0
        %200 = vst.msk [vmem:[%s184 + $0x18] sm:$0xff] %vm196, 0.0
        %201 = vst.msk [vmem:[%s190] sm:$0xff] %vm196, -inf
        %202 = vst.msk [vmem:[%s190 + $0x8] sm:$0xff] %vm196, -inf
        %203 = vst.msk [vmem:[%s190 + $0x10] sm:$0xff] %vm196, -inf
        %204 = vst.msk [vmem:[%s190 + $0x18] sm:$0xff] %vm196, -inf
      $region28: #{channel_attention.2} parent=23 // pred_fallthru
        _
      %v205 = vld [vmem:[%s177] sm:$0xff]
      %v206 = vld [vmem:[%s177 + $0x8] sm:$0xff]
      %v207 = vld [vmem:[%s177 + $0x10] sm:$0xff]
      %v208 = vld [vmem:[%s177 + $0x18] sm:$0xff]
      %v209 = vld [vmem:[%s177 + $0x20] sm:$0xff]
      %v210 = vld [vmem:[%s177 + $0x28] sm:$0xff]
      %v211 = vld [vmem:[%s177 + $0x30] sm:$0xff]
      %v212 = vld [vmem:[%s177 + $0x38] sm:$0xff]
      %v213 = vld [vmem:[%s177 + $0x40] sm:$0xff]
      %v214 = vld [vmem:[%s177 + $0x48] sm:$0xff]
      %v215 = vld [vmem:[%s177 + $0x50] sm:$0xff]
      %v216 = vld [vmem:[%s177 + $0x58] sm:$0xff]
      %v217 = vld [vmem:[%s177 + $0x60] sm:$0xff]
      %v218 = vld [vmem:[%s177 + $0x68] sm:$0xff]
      %v219 = vld [vmem:[%s177 + $0x70] sm:$0xff]
      %v220 = vld [vmem:[%s177 + $0x78] sm:$0xff]
      %v221 = vld [vmem:[%s184] sm:$0xff]
      %v222 = vld [vmem:[%s184 + $0x8] sm:$0xff]
      %v223 = vld [vmem:[%s184 + $0x10] sm:$0xff]
      %v224 = vld [vmem:[%s184 + $0x18] sm:$0xff]
      %v225 = vadd.f32 %v205, %v206
      %v226 = vadd.f32 %v225, %v207
      %v227 = vadd.f32 %v226, %v208
      %228 = vadd.xlane.f32.xlu0 %v227
      %v229 = vpop.xlane.xlu0 %228
      %v230 = vadd.f32 %v209, %v210
      %v231 = vadd.f32 %v230, %v211
      %v232 = vadd.f32 %v231, %v212
      %233 = vadd.xlane.f32.xlu0 %v232
      %v234 = vpop.xlane.xlu0 %233
      %v235 = vadd.f32 %v213, %v214
      %v236 = vadd.f32 %v235, %v215
      %v237 = vadd.f32 %v236, %v216
      %238 = vadd.xlane.f32.xlu0 %v237
      %v239 = vpop.xlane.xlu0 %238
      %v240 = vadd.f32 %v217, %v218
      %v241 = vadd.f32 %v240, %v219
      %v242 = vadd.f32 %v241, %v220
      %243 = vadd.xlane.f32.xlu0 %v242
      %v244 = vpop.xlane.xlu0 %243
      %v245 = vadd.f32 %v221, %v229
      %v246 = vadd.f32 %v222, %v234
      %v247 = vadd.f32 %v223, %v239
      %v248 = vadd.f32 %v224, %v244
      %vm249 = vcmask 7168
      %250 = vst.msk [vmem:[%s184] sm:$0xff] %vm249, %v245
      %251 = vst.msk [vmem:[%s184 + $0x8] sm:$0xff] %vm249, %v246
      %252 = vst.msk [vmem:[%s184 + $0x10] sm:$0xff] %vm249, %v247
      %253 = vst.msk [vmem:[%s184 + $0x18] sm:$0xff] %vm249, %v248
      %v254 = vld [vmem:[%s190] sm:$0xff]
      %v255 = vld [vmem:[%s190 + $0x8] sm:$0xff]
      %v256 = vld [vmem:[%s190 + $0x10] sm:$0xff]
      %v257 = vld [vmem:[%s190 + $0x18] sm:$0xff]
      %v258 = vmax.f32 %v205, %v206
      %v259 = vmax.f32 %v258, %v207
      %v260 = vmax.f32 %v259, %v208
      %261 = vmax.xlane.f32.xlu0 %v260
      %v262 = vpop.xlane.xlu0 %261
      %v263 = vmax.f32 %v209, %v210
      %v264 = vmax.f32 %v263, %v211
      %v265 = vmax.f32 %v264, %v212
      %266 = vmax.xlane.f32.xlu0 %v265
      %v267 = vpop.xlane.xlu0 %266
      %v268 = vmax.f32 %v213, %v214
      %v269 = vmax.f32 %v268, %v215
      %v270 = vmax.f32 %v269, %v216
      %271 = vmax.xlane.f32.xlu0 %v270
      %v272 = vpop.xlane.xlu0 %271
      %v273 = vmax.f32 %v217, %v218
      %v274 = vmax.f32 %v273, %v219
      %v275 = vmax.f32 %v274, %v220
      %276 = vmax.xlane.f32.xlu0 %v275
      %v277 = vpop.xlane.xlu0 %276
      %v278 = vmax.f32 %v254, %v262
      %v279 = vmax.f32 %v255, %v267
      %v280 = vmax.f32 %v256, %v272
      %v281 = vmax.f32 %v257, %v277
      %282 = vst.msk [vmem:[%s190] sm:$0xff] %vm249, %v278
      %283 = vst.msk [vmem:[%s190 + $0x8] sm:$0xff] %vm249, %v279
      %284 = vst.msk [vmem:[%s190 + $0x10] sm:$0xff] %vm249, %v280
      %285 = vst.msk [vmem:[%s190 + $0x18] sm:$0xff] %vm249, %v281
      %s286 = smul.u32 4, %s18
      %p287 = scmp.lt.s32.totalorder %s286, 7
      %s288 = scalar_select %p287, %s286, 7
      %s289 = smul.addr %s288, 8
      %s290 = scalar_lea.vmem %s1, %s289
      %s291 = smul.u32 4, %s18
      %p292 = scmp.lt.s32.totalorder %s291, 7
      %s293 = scalar_select %p292, %s291, 7
      %s294 = smul.addr %s293, 8
      %s295 = scalar_lea.vmem %s2, %s294
      // Predicated region
      $region29: #{channel_attention.2} parent=23 // pred_check
        %p296 = pneg %p72
      $region30: #{channel_attention.2} parent=23 // pred_check_branch
        %298 = sbr.rel (%p296) target = $region32
      $region31: #{channel_attention.2} parent=23 // pred_region
        %s299 = smul.u32 4, %s18
      $region32: #{channel_attention.2} parent=23 // pred_fallthru
        _
      // Predicated region
      $region33: #{channel_attention.2} parent=23 // pred_check
        %p300 = pneg %p98
      $region34: #{channel_attention.2} parent=23 // pred_check_branch
        %302 = sbr.rel (%p300) target = $region36
      $region35: #{channel_attention.2} parent=23 // pred_region
        %s303 = smul.u32 4, %s18
      $region36: #{channel_attention.2} parent=23 // pred_fallthru
        _
    $region24: #{channel_attention.2} parent=5 // pred_fallthru
      _
    %p304 = scmp.le.s32.totalorder 2, %s9
    // Predicated region
    $region37: #{channel_attention.2} parent=5 // pred_check
      %p305 = pneg %p304
    $region38: #{channel_attention.2} parent=5 // pred_check_branch
      %307 = sbr.rel (%p305) target = $region40
    $region39: #{channel_attention.2} parent=5 // pred_region
      %s308 = ssub.s32 %s9, 2
      // Predicated region
      $region41: #{channel_attention.2} parent=39 // pred_check
        %p309 = pneg %p78
      $region42: #{channel_attention.2} parent=39 // pred_check_branch
        %311 = sbr.rel (%p309) target = $region44
      $region43: #{channel_attention.2} parent=39 // pred_region
        %s312 = smul.u32 4, %s20
        %p313 = scmp.lt.s32.totalorder %s312, 7
        %s314 = scalar_select %p313, %s312, 7
        %s315 = smul.addr %s314, 8
        %s316 = scalar_lea.vmem %s1, %s315
      $region44: #{channel_attention.2} parent=39 // pred_fallthru
        _
      // Predicated region
      $region45: #{channel_attention.2} parent=39 // pred_check
        %p317 = pneg %p104
      $region46: #{channel_attention.2} parent=39 // pred_check_branch
        %319 = sbr.rel (%p317) target = $region48
      $region47: #{channel_attention.2} parent=39 // pred_region
        %s320 = smul.u32 4, %s20
        %p321 = scmp.lt.s32.totalorder %s320, 7
        %s322 = scalar_select %p321, %s320, 7
        %s323 = smul.addr %s322, 8
        %s324 = scalar_lea.vmem %s2, %s323
      $region48: #{channel_attention.2} parent=39 // pred_fallthru
        _
    $region40: #{channel_attention.2} parent=5 // pred_fallthru
      _
  $region6: #{channel_attention.2} parent=0 // loop_footer
    %s13 = sadd.s32 1, %s9
  $region7: #{channel_attention.2} parent=0 // loop_footer_branch
    %8 = sbr.rel target = $region3
  $region8: #{channel_attention.2} parent=0 // loop_exit
    _

// kernel: channel_attention.3
$region0: #{channel_attention.3}
  #allocation0 [shape = 'u32[]', space=smem, size = 0x4, offset = 0x4, fixed_abs, tag = 'smem constant byte address 0x4 - core index']
  #allocation1 [shape = 'u32[144,128]{1,0:T(1,128)}', space=vmem, size = 0x12000, scoped, tag = 'internal scratch']
  %s0 = inlined_call_operand.vmem [shape: f32[64,512], index: 0, kind: input, shape index: {}]
  %s1 = inlined_call_operand.vmem [shape: f32[64,1], index: 1, kind: input, shape index: {}]
  %s2 = inlined_call_operand.vmem [shape: f32[64,512], index: 2, kind: output, shape index: {}]
  %s3 = sld [smem:[#allocation0]]
  $region18: #{channel_attention.3} parent=0
    _
  %s5 = ssub.s32 1, %s3
  %s6 = scalar_select 0, %s5, %s3
  // Predicated region
  $region2: #{channel_attention.3} parent=0 // pred_check
    _
  $region3: #{channel_attention.3} parent=0 // pred_check_branch
    %8 = sbr.rel (0) target = $region5
  $region4: #{channel_attention.3} parent=0 // pred_region
    _
  $region5: #{channel_attention.3} parent=0 // pred_fallthru
    _
  // Predicated region
  $region6: #{channel_attention.3} parent=0 // pred_check
    _
  $region7: #{channel_attention.3} parent=0 // pred_check_branch
    %10 = sbr.rel (0) target = $region9
  $region8: #{channel_attention.3} parent=0 // pred_region
    _
  $region9: #{channel_attention.3} parent=0 // pred_fallthru
    _
  %v11 = vld [vmem:[%s0] sm:$0xff]
  %v12 = vld [vmem:[%s0 + $0x8] sm:$0xff]
  %v13 = vld [vmem:[%s0 + $0x10] sm:$0xff]
  %v14 = vld [vmem:[%s0 + $0x18] sm:$0xff]
  %v15 = vld [vmem:[%s0 + $0x20] sm:$0xff]
  %v16 = vld [vmem:[%s0 + $0x28] sm:$0xff]
  %v17 = vld [vmem:[%s0 + $0x30] sm:$0xff]
  %v18 = vld [vmem:[%s0 + $0x38] sm:$0xff]
  %v19 = vld [vmem:[%s0 + $0x40] sm:$0xff]
  %v20 = vld [vmem:[%s0 + $0x48] sm:$0xff]
  %v21 = vld [vmem:[%s0 + $0x50] sm:$0xff]
  %v22 = vld [vmem:[%s0 + $0x58] sm:$0xff]
  %v23 = vld [vmem:[%s0 + $0x60] sm:$0xff]
  %v24 = vld [vmem:[%s0 + $0x68] sm:$0xff]
  %v25 = vld [vmem:[%s0 + $0x70] sm:$0xff]
  %v26 = vld [vmem:[%s0 + $0x78] sm:$0xff]
  %v27 = vld [vmem:[%s0 + $0x80] sm:$0xff]
  %v28 = vld [vmem:[%s0 + $0x88] sm:$0xff]
  %v29 = vld [vmem:[%s0 + $0x90] sm:$0xff]
  %v30 = vld [vmem:[%s0 + $0x98] sm:$0xff]
  %v31 = vld [vmem:[%s0 + $0xa0] sm:$0xff]
  %v32 = vld [vmem:[%s0 + $0xa8] sm:$0xff]
  %v33 = vld [vmem:[%s0 + $0xb0] sm:$0xff]
  %v34 = vld [vmem:[%s0 + $0xb8] sm:$0xff]
  %v35 = vld [vmem:[%s0 + $0xc0] sm:$0xff]
  %v36 = vld [vmem:[%s0 + $0xc8] sm:$0xff]
  %v37 = vld [vmem:[%s0 + $0xd0] sm:$0xff]
  %v38 = vld [vmem:[%s0 + $0xd8] sm:$0xff]
  %v39 = vld [vmem:[%s0 + $0xe0] sm:$0xff]
  %v40 = vld [vmem:[%s0 + $0xe8] sm:$0xff]
  %v41 = vld [vmem:[%s0 + $0xf0] sm:$0xff]
  %v42 = vld [vmem:[%s0 + $0xf8] sm:$0xff]
  %v43 = vld [vmem:[%s1] sm:$0xff]
  %v44 = vld [vmem:[%s1 + $0x8] sm:$0xff]
  %v45 = vld [vmem:[%s1 + $0x10] sm:$0xff]
  %v46 = vld [vmem:[%s1 + $0x18] sm:$0xff]
  %v47 = vld [vmem:[%s1 + $0x20] sm:$0xff]
  %v48 = vld [vmem:[%s1 + $0x28] sm:$0xff]
  %v49 = vld [vmem:[%s1 + $0x30] sm:$0xff]
  %v50 = vld [vmem:[%s1 + $0x38] sm:$0xff]
  %52 = vset.pattern.permute.xlu0 0
  %53 = vperm.xlu0 %52, %v43
  %v54 = vpop.permute.xlu0 %53
  %57 = vset.pattern.permute.xlu0 0
  %58 = vperm.xlu0 %57, %v44
  %v59 = vpop.permute.xlu0 %58
  %62 = vset.pattern.permute.xlu0 0
  %63 = vperm.xlu0 %62, %v45
  %v64 = vpop.permute.xlu0 %63
  %67 = vset.pattern.permute.xlu0 0
  %68 = vperm.xlu0 %67, %v46
  %v69 = vpop.permute.xlu0 %68
  %72 = vset.pattern.permute.xlu0 0
  %73 = vperm.xlu0 %72, %v47
  %v74 = vpop.permute.xlu0 %73
  %77 = vset.pattern.permute.xlu0 0
  %78 = vperm.xlu0 %77, %v48
  %v79 = vpop.permute.xlu0 %78
  %82 = vset.pattern.permute.xlu0 0
  %83 = vperm.xlu0 %82, %v49
  %v84 = vpop.permute.xlu0 %83
  %87 = vset.pattern.permute.xlu0 0
  %88 = vperm.xlu0 %87, %v50
  %v89 = vpop.permute.xlu0 %88
  %v91 = vmul.f32 %v11, %v54
  %v92 = vmul.f32 %v12, %v54
  %v93 = vmul.f32 %v13, %v54
  %v94 = vmul.f32 %v14, %v54
  %v95 = vmul.f32 %v15, %v59
  %v96 = vmul.f32 %v16, %v59
  %v97 = vmul.f32 %v17, %v59
  %v98 = vmul.f32 %v18, %v59
  %v99 = vmul.f32 %v19, %v64
  %v100 = vmul.f32 %v20, %v64
  %v101 = vmul.f32 %v21, %v64
  %v102 = vmul.f32 %v22, %v64
  %v103 = vmul.f32 %v23, %v69
  %v104 = vmul.f32 %v24, %v69
  %v105 = vmul.f32 %v25, %v69
  %v106 = vmul.f32 %v26, %v69
  %v107 = vmul.f32 %v27, %v74
  %v108 = vmul.f32 %v28, %v74
  %v109 = vmul.f32 %v29, %v74
  %v110 = vmul.f32 %v30, %v74
  %v111 = vmul.f32 %v31, %v79
  %v112 = vmul.f32 %v32, %v79
  %v113 = vmul.f32 %v33, %v79
  %v114 = vmul.f32 %v34, %v79
  %v115 = vmul.f32 %v35, %v84
  %v116 = vmul.f32 %v36, %v84
  %v117 = vmul.f32 %v37, %v84
  %v118 = vmul.f32 %v38, %v84
  %v119 = vmul.f32 %v39, %v89
  %v120 = vmul.f32 %v40, %v89
  %v121 = vmul.f32 %v41, %v89
  %v122 = vmul.f32 %v42, %v89
  %123 = vst [vmem:[%s2] sm:$0xff] %v91
  %124 = vst [vmem:[%s2 + $0x8] sm:$0xff] %v92
  %125 = vst [vmem:[%s2 + $0x10] sm:$0xff] %v93
  %126 = vst [vmem:[%s2 + $0x18] sm:$0xff] %v94
  %127 = vst [vmem:[%s2 + $0x20] sm:$0xff] %v95
  %128 = vst [vmem:[%s2 + $0x28] sm:$0xff] %v96
  %129 = vst [vmem:[%s2 + $0x30] sm:$0xff] %v97
  %130 = vst [vmem:[%s2 + $0x38] sm:$0xff] %v98
  %131 = vst [vmem:[%s2 + $0x40] sm:$0xff] %v99
  %132 = vst [vmem:[%s2 + $0x48] sm:$0xff] %v100
  %133 = vst [vmem:[%s2 + $0x50] sm:$0xff] %v101
  %134 = vst [vmem:[%s2 + $0x58] sm:$0xff] %v102
  %135 = vst [vmem:[%s2 + $0x60] sm:$0xff] %v103
  %136 = vst [vmem:[%s2 + $0x68] sm:$0xff] %v104
  %137 = vst [vmem:[%s2 + $0x70] sm:$0xff] %v105
  %138 = vst [vmem:[%s2 + $0x78] sm:$0xff] %v106
  %139 = vst [vmem:[%s2 + $0x80] sm:$0xff] %v107
  %140 = vst [vmem:[%s2 + $0x88] sm:$0xff] %v108
  %141 = vst [vmem:[%s2 + $0x90] sm:$0xff] %v109
  %142 = vst [vmem:[%s2 + $0x98] sm:$0xff] %v110
  %143 = vst [vmem:[%s2 + $0xa0] sm:$0xff] %v111
  %144 = vst [vmem:[%s2 + $0xa8] sm:$0xff] %v112
  %145 = vst [vmem:[%s2 + $0xb0] sm:$0xff] %v113
  %146 = vst [vmem:[%s2 + $0xb8] sm:$0xff] %v114
  %147 = vst [vmem:[%s2 + $0xc0] sm:$0xff] %v115
  %148 = vst [vmem:[%s2 + $0xc8] sm:$0xff] %v116
  %149 = vst [vmem:[%s2 + $0xd0] sm:$0xff] %v117
  %150 = vst [vmem:[%s2 + $0xd8] sm:$0xff] %v118
  %151 = vst [vmem:[%s2 + $0xe0] sm:$0xff] %v119
  %152 = vst [vmem:[%s2 + $0xe8] sm:$0xff] %v120
  %153 = vst [vmem:[%s2 + $0xf0] sm:$0xff] %v121
  %154 = vst [vmem:[%s2 + $0xf8] sm:$0xff] %v122
  // Predicated region
  $region10: #{channel_attention.3} parent=0 // pred_check
    _
  $region11: #{channel_attention.3} parent=0 // pred_check_branch
    %156 = sbr.rel (0) target = $region13
  $region12: #{channel_attention.3} parent=0 // pred_region
    _
  $region13: #{channel_attention.3} parent=0 // pred_fallthru
    _
  // Predicated region
  $region14: #{channel_attention.3} parent=0 // pred_check
    _
  $region15: #{channel_attention.3} parent=0 // pred_check_branch
    %158 = sbr.rel (0) target = $region17
  $region16: #{channel_attention.3} parent=0 // pred_region
    _
  $region17: #{channel_attention.3} parent=0 // pred_fallthru
    _

</llo_original>
